<compile_context>
chip_gen: v5e
topology: v5e:2x2
jax: 0.10.0
libtpu: 0.0.40
codegen_flags: <defaults>
</compile_context>

<pallas_src>
import jax
import jax.numpy as jnp
from jax.experimental import pallas as pl
from jax.experimental.pallas import tpu as pltpu


def _attn_rowsum_kernel(x_ref, w_ref, b_ref, o_ref):
    # Unpacked path (F >= 128 or not evenly packable).
    # x_ref: (TM, F), w_ref: (1, F), b_ref: (1,) in SMEM, o_ref: (TM, F).
    x = x_ref[...].astype(jnp.float32)
    # Keep the N=1 reduction on VPU+XLU (an N=1 MXU matmul would be wasted).
    logits = jnp.sum(x * w_ref[...].astype(jnp.float32), axis=-1, keepdims=True)
    gate = jax.nn.sigmoid(logits + b_ref[0])                    # (TM, 1), EUP exp
    o_ref[...] = (x * gate).astype(o_ref.dtype)


def _attn_packed_kernel(x_ref, wblk_ref, segt_ref, b_ref, o_ref):
    # Lane-packed path: G = 128 // F logical rows per 128-lane row.
    # x_ref: (TM, 128), wblk_ref: (128, G) block-diagonal weights,
    # segt_ref: (G, 128) 0/1 segment selector, b_ref: (1,) in SMEM.
    x = x_ref[...].astype(jnp.float32)
    logits = jnp.dot(x, wblk_ref[...],
                     preferred_element_type=jnp.float32,
                     precision=jax.lax.Precision.HIGHEST)       # (TM, G)
    gate = jax.nn.sigmoid(logits + b_ref[0])                    # sigmoid on tiny (TM, G)
    gate_full = jnp.dot(gate, segt_ref[...],
                        preferred_element_type=jnp.float32,
                        precision=jax.lax.Precision.HIGHEST)    # (TM, 128) broadcast back
    o_ref[...] = (x * gate_full).astype(o_ref.dtype)


def attention_block(x, weight, bias, *, target_tile_rows=8192,
                    vmem_limit_bytes=48 * 1024 * 1024):
    """x: (B, S, F); weight: (1, F); bias: (1,).  Returns x * sigmoid(x @ w.T + b)."""
    B, S, F = x.shape
    M = B * S
    dtype = x.dtype
    bias_sc = bias.reshape(1).astype(jnp.float32)

    packed = (F < 128) and (128 % F == 0) and ((M * F) % 128 == 0)
    if packed:
        num_seg = 128 // F
        row_w = 128
        m_rows = (M * F) // 128
        x2d = x.reshape(m_rows, row_w)                 # contiguous: no data movement
        lane = jnp.arange(row_w, dtype=jnp.int32)
        seg = lane[:, None] // F == jnp.arange(num_seg, dtype=jnp.int32)[None, :]
        w_tiled = jnp.tile(weight.reshape(F).astype(jnp.float32), (num_seg,))
        wblk = jnp.where(seg, w_tiled[:, None], 0.0)   # (128, G) block-diagonal weights
        segt = seg.T.astype(jnp.float32)               # (G, 128) gate broadcast selector
        kernel = _attn_packed_kernel
        extra_inputs = (wblk, segt)
        extra_specs = [
            pl.BlockSpec((row_w, num_seg), lambda i: (0, 0)),   # resident (fetched once)
            pl.BlockSpec((num_seg, row_w), lambda i: (0, 0)),   # resident (fetched once)
        ]
    else:
        row_w = F
        m_rows = M
        x2d = x.reshape(m_rows, row_w)
        kernel = _attn_rowsum_kernel
        extra_inputs = (weight.reshape(1, F).astype(jnp.float32),)
        extra_specs = [pl.BlockSpec((1, row_w), lambda i: (0, 0))]   # resident

    # Row-tile sizing: big tiles amortize the ~0.35 us per-grid-step overhead;
    # keep in+out double-buffered tiles (4 live copies) under a budget that is
    # safe for v7x's 64 MiB physical VMEM while still near HBM roofline.
    itemsize = jnp.dtype(dtype).itemsize
    sub = {4: 8, 2: 16, 1: 32}.get(itemsize, 8)        # sublane packing multiple
    tile_budget_bytes = 24 * 1024 * 1024
    max_tile = max(sub, (tile_budget_bytes // (4 * row_w * itemsize)) // sub * sub)
    tile_m = max(sub, (min(target_tile_rows, max_tile) // sub) * sub)
    if m_rows <= tile_m:
        tile_m = m_rows            # tiny problem: single grid step, full-array block
    grid = (pl.cdiv(m_rows, tile_m),)

    out = pl.pallas_call(
        kernel,
        out_shape=jax.ShapeDtypeStruct((m_rows, row_w), dtype),
        grid_spec=pltpu.PrefetchScalarGridSpec(
            num_scalar_prefetch=0,
            grid=grid,
            in_specs=[pl.BlockSpec((tile_m, row_w), lambda i: (i, 0))]   # x row tiles
                     + extra_specs
                     + [pl.BlockSpec(memory_space=pltpu.MemorySpace.SMEM)],  # bias scalar
            out_specs=pl.BlockSpec((tile_m, row_w), lambda i: (i, 0)),
        ),
        compiler_params=pltpu.CompilerParams(
            dimension_semantics=("parallel",),   # shards row tiles across v7x's 2 TCs
            vmem_limit_bytes=vmem_limit_bytes,
        ),
    )(x2d, *extra_inputs, bias_sc)
    return out.reshape(B, S, F)


if __name__ == "__main__":
    key = jax.random.PRNGKey(0)
    B, S, F = 2, 8, 32   # batch=2, seq=8, in_features=32

    kx, kw, kb = jax.random.split(key, 3)
    x = jax.random.normal(kx, (B, S, F), dtype=jnp.float32)
    # deterministic init of nn.Linear(F, 1) params (uniform like PyTorch default)
    bound = 1.0 / jnp.sqrt(F)
    weight = jax.random.uniform(kw, (1, F), dtype=jnp.float32, minval=-bound, maxval=bound)
    bias = jax.random.uniform(kb, (1,), dtype=jnp.float32, minval=-bound, maxval=bound)

    out = attention_block(x, weight, bias)
    out = jax.block_until_ready(out)

    # reference check in plain JAX
    ref = x * jax.nn.sigmoid(jnp.einsum("bsf,of->bso", x, weight) + bias)
    assert jnp.allclose(out, ref, atol=1e-5, rtol=1e-5), "mismatch vs reference"

    print("KERNEL_OK")
</pallas_src>

<mosaic_0001>
module attributes {stable_mosaic.version = 11 : i64} {
  func.func @_attn_packed_kernel(%arg0: i32, %arg1: memref<4x128xf32, #tpu.memory_space<vmem>>, %arg2: memref<128x4xf32, #tpu.memory_space<vmem>>, %arg3: memref<4x128xf32, #tpu.memory_space<vmem>>, %arg4: memref<1xf32, #tpu.memory_space<smem>>, %arg5: memref<4x128xf32, #tpu.memory_space<vmem>>) attributes {dimension_semantics = [#tpu.dimension_semantics<parallel>], iteration_bounds = array<i64: 1>, scalar_prefetch = 0 : i64, scratch_operands = 0 : i64, tpu.core_type = #tpu.core_type<tc>, window_params = [{transform_indices = @transform_0, window_bounds = array<i64: 4, 128>}, {pipeline_mode = #tpu.pipeline_mode<synchronous>, transform_indices = @transform_1, window_bounds = array<i64: 128, 4>}, {pipeline_mode = #tpu.pipeline_mode<synchronous>, transform_indices = @transform_2, window_bounds = array<i64: 4, 128>}, {transform_indices = @transform_3, window_bounds = array<i64: 1>}, {transform_indices = @transform_4, window_bounds = array<i64: 4, 128>}]} {
    %c0 = arith.constant 0 : index
    %c0_0 = arith.constant 0 : index
    %0 = vector.load %arg1[%c0, %c0_0] : memref<4x128xf32, #tpu.memory_space<vmem>>, vector<4x128xf32>
    %c0_1 = arith.constant 0 : index
    %c0_2 = arith.constant 0 : index
    %1 = vector.load %arg2[%c0_1, %c0_2] : memref<128x4xf32, #tpu.memory_space<vmem>>, vector<128x4xf32>
    %cst = arith.constant dense<0.000000e+00> : vector<4x4xf32>
    %2 = tpu.matmul %0, %1, %cst {dimension_numbers = #tpu.dot_dimension_numbers<[1], [0], [0], [1], [0, 0, 1, 1], [], []>, precision = #tpu.contract_precision<fp32>} : vector<4x128xf32>, vector<128x4xf32>, vector<4x4xf32> -> vector<4x4xf32>
    %c0_3 = arith.constant 0 : index
    %3 = memref.load %arg4[%c0_3] : memref<1xf32, #tpu.memory_space<smem>>
    %4 = vector.broadcast %3 : f32 to vector<4x4xf32>
    %5 = arith.addf %2, %4 : vector<4x4xf32>
    %6 = arith.negf %5 : vector<4x4xf32>
    %7 = math.exp %6 : vector<4x4xf32>
    %cst_4 = arith.constant 1.000000e+00 : f32
    %8 = vector.broadcast %cst_4 : f32 to vector<4x4xf32>
    %9 = arith.addf %8, %7 : vector<4x4xf32>
    %10 = arith.divf %8, %9 : vector<4x4xf32>
    %c0_5 = arith.constant 0 : index
    %c0_6 = arith.constant 0 : index
    %11 = vector.load %arg3[%c0_5, %c0_6] : memref<4x128xf32, #tpu.memory_space<vmem>>, vector<4x128xf32>
    %cst_7 = arith.constant dense<0.000000e+00> : vector<4x128xf32>
    %12 = tpu.matmul %10, %11, %cst_7 {dimension_numbers = #tpu.dot_dimension_numbers<[1], [0], [0], [1], [0, 0, 1, 1], [], []>, precision = #tpu.contract_precision<fp32>} : vector<4x4xf32>, vector<4x128xf32>, vector<4x128xf32> -> vector<4x128xf32>
    %13 = arith.mulf %0, %12 : vector<4x128xf32>
    %c0_8 = arith.constant 0 : index
    %c0_9 = arith.constant 0 : index
    %14 = vector.load %arg5[%c0_8, %c0_9] : memref<4x128xf32, #tpu.memory_space<vmem>>, vector<4x128xf32>
    tpu.vector_store %arg5[%c0_8, %c0_9], %13 {strides = array<i32>} : memref<4x128xf32, #tpu.memory_space<vmem>>, vector<4x128xf32>,
    return
  }
  func.func @transform_0(%arg0: i32) -> (i32, i32) {
    %c0_i32 = arith.constant 0 : i32
    %c0_i32_0 = arith.constant 0 : i32
    return %arg0, %c0_i32 : i32, i32
  }
  func.func @transform_1(%arg0: i32) -> (i32, i32) {
    %c0_i32 = arith.constant 0 : i32
    %c0_i32_0 = arith.constant 0 : i32
    %c0_i32_1 = arith.constant 0 : i32
    return %c0_i32, %c0_i32_0 : i32, i32
  }
  func.func @transform_2(%arg0: i32) -> (i32, i32) {
    %c0_i32 = arith.constant 0 : i32
    %c0_i32_0 = arith.constant 0 : i32
    %c0_i32_1 = arith.constant 0 : i32
    return %c0_i32, %c0_i32_0 : i32, i32
  }
  func.func @transform_3(%arg0: i32) -> i32 {
    %c0_i32 = arith.constant 0 : i32
    %c0_i32_0 = arith.constant 0 : i32
    return %c0_i32 : i32
  }
  func.func @transform_4(%arg0: i32) -> (i32, i32) {
    %c0_i32 = arith.constant 0 : i32
    %c0_i32_0 = arith.constant 0 : i32
    return %arg0, %c0_i32 : i32, i32
  }
}

</mosaic_0001>

<llo_original>
// kernel: tpu_custom_call.1
$region0: #{tpu_custom_call.1}
  #allocation0 [shape = 'u32[]', space=smem, size = 0x4, offset = 0x4, fixed_abs, tag = 'smem constant byte address 0x4 - core index']
  #allocation1 [shape = 'u32[72,128]{1,0:T(1,128)}', space=vmem, size = 0x9000, scoped, tag = 'internal scratch']
  #allocation2 [shape = 'f32[1]{0:T(128)S(6)}', space=smem, size = 0x200, scoped, tag = 'scoped memory for tpu_custom_call.1']
  %s0 = inlined_call_operand.vmem [shape: f32[4,128], index: 0, kind: input, shape index: {}]
  %s1 = inlined_call_operand.vmem [shape: f32[128,4], index: 1, kind: input, shape index: {}]
  %s2 = inlined_call_operand.vmem [shape: f32[4,128], index: 2, kind: input, shape index: {}]
  %s3 = inlined_call_operand.<no memory space> [shape: f32[1], index: 3, kind: input, shape index: {}]
  %s4 = inlined_call_operand.hbm [shape: f32[4,128], index: 4, kind: output, shape index: {}]
  %s5 = sld [smem:[#allocation0]]
  $region26: #{tpu_custom_call.1} parent=0
    _
  %s7 = ssub.s32 1, %s5
  %s8 = scalar_select 0, %s7, %s5
  %9 = sst [smem:[#allocation2]] %s3
  $region1: #{tpu_custom_call.1} parent=0
    #allocation3 [shape = 'u8[2048]{0}', space=vmem, size = 0x800, scoped, tag = 'output window, operand 0, single buffered']
    #allocation4 [shape = 's32[1]{0}', space=sflag, size = 0x4, scoped, tag = 'scoped memory for tpu_custom_call.1']
    %10 = vsyncpa [#allocation4], 0
    // Predicated region
    $region2: #{tpu_custom_call.1} parent=1 // pred_check
      _
    $region3: #{tpu_custom_call.1} parent=1 // pred_check_branch
      %12 = sbr.rel (0) target = $region5
    $region4: #{tpu_custom_call.1} parent=1 // pred_region
      _
    $region5: #{tpu_custom_call.1} parent=1 // pred_fallthru
      _
    // Predicated region
    $region6: #{tpu_custom_call.1} parent=1 // pred_check
      _
    $region7: #{tpu_custom_call.1} parent=1 // pred_check_branch
      %14 = sbr.rel (0) target = $region9
    $region8: #{tpu_custom_call.1} parent=1 // pred_region
      _
    $region9: #{tpu_custom_call.1} parent=1 // pred_fallthru
      _
    // Predicated region
    $region10: #{tpu_custom_call.1} parent=1 // pred_check
      _
    $region11: #{tpu_custom_call.1} parent=1 // pred_check_branch
      %16 = sbr.rel (0) target = $region13
    $region12: #{tpu_custom_call.1} parent=1 // pred_region
      _
    $region13: #{tpu_custom_call.1} parent=1 // pred_fallthru
      _
    // Predicated region
    $region14: #{tpu_custom_call.1} parent=1 // pred_check
      _
    $region15: #{tpu_custom_call.1} parent=1 // pred_check_branch
      %18 = sbr.rel (0) target = $region17
    $region16: #{tpu_custom_call.1} parent=1 // pred_region
      _
    $region17: #{tpu_custom_call.1} parent=1 // pred_fallthru
      _
    %v19 = vld [vmem:[%s0] sm:$0xf]
    %v20 = vld [vmem:[%s1] sm:$0xff]
    %v21 = vld [vmem:[%s1 + $0x8] sm:$0xff]
    %v22 = vld [vmem:[%s1 + $0x10] sm:$0xff]
    %v23 = vld [vmem:[%s1 + $0x18] sm:$0xff]
    %v24 = vld [vmem:[%s1 + $0x20] sm:$0xff]
    %v25 = vld [vmem:[%s1 + $0x28] sm:$0xff]
    %v26 = vld [vmem:[%s1 + $0x30] sm:$0xff]
    %v27 = vld [vmem:[%s1 + $0x38] sm:$0xff]
    %v28 = vld [vmem:[%s1 + $0x40] sm:$0xff]
    %v29 = vld [vmem:[%s1 + $0x48] sm:$0xff]
    %v30 = vld [vmem:[%s1 + $0x50] sm:$0xff]
    %v31 = vld [vmem:[%s1 + $0x58] sm:$0xff]
    %v32 = vld [vmem:[%s1 + $0x60] sm:$0xff]
    %v33 = vld [vmem:[%s1 + $0x68] sm:$0xff]
    %v34 = vld [vmem:[%s1 + $0x70] sm:$0xff]
    %v35 = vld [vmem:[%s1 + $0x78] sm:$0xff]
    %s36 = sld [smem:[#allocation2]]
    %v37 = vstv %s36
    %v38 = vand.u32 %v35, 4294901760
    %39 = vmatpush.msra.mxu0 %v38
    %v40 = vand.u32 %v34, 4294901760
    %41 = vmatpush.msra.mxu0 %v40
    %v42 = vand.u32 %v33, 4294901760
    %43 = vmatpush.msra.mxu0 %v42
    %v44 = vand.u32 %v32, 4294901760
    %45 = vmatpush.msra.mxu0 %v44
    %v46 = vand.u32 %v31, 4294901760
    %47 = vmatpush.msra.mxu0 %v46
    %v48 = vand.u32 %v30, 4294901760
    %49 = vmatpush.msra.mxu0 %v48
    %v50 = vand.u32 %v29, 4294901760
    %51 = vmatpush.msra.mxu0 %v50
    %v52 = vand.u32 %v28, 4294901760
    %53 = vmatpush.msra.mxu0 %v52
    %v54 = vand.u32 %v27, 4294901760
    %55 = vmatpush.msra.mxu0 %v54
    %v56 = vand.u32 %v26, 4294901760
    %57 = vmatpush.msra.mxu0 %v56
    %v58 = vand.u32 %v25, 4294901760
    %59 = vmatpush.msra.mxu0 %v58
    %v60 = vand.u32 %v24, 4294901760
    %61 = vmatpush.msra.mxu0 %v60
    %v62 = vand.u32 %v23, 4294901760
    %63 = vmatpush.msra.mxu0 %v62
    %v64 = vand.u32 %v22, 4294901760
    %65 = vmatpush.msra.mxu0 %v64
    %v66 = vand.u32 %v21, 4294901760
    %67 = vmatpush.msra.mxu0 %v66
    %v68 = vand.u32 %v20, 4294901760
    %69 = vmatpush.msra.mxu0 %v68
    %v70 = vand.u32 %v19, 4294901760
    %v71 = vsub.f32 %v19, %v70
    %v72 = vand.u32 %v71, 4294901760
    %v73 = vsub.f32 %v71, %v72
    %v74 = vand.u32 %v73, 4294901760
    %75 = vmatmul.f32.gmra.mxu0 %v74
    %v76 = vpop.f32.mrf.mxu0
    %v77 = vadd.f32 %v37, %v76
    %78 = vdwg.mxu0
    %v79 = vand.u32 %v35, 4294901760
    %v80 = vsub.f32 %v35, %v79
    %v81 = vand.u32 %v80, 4294901760
    %v82 = vsub.f32 %v80, %v81
    %v83 = vand.u32 %v82, 4294901760
    %84 = vmatpush.msra.mxu0 %v83
    %v85 = vand.u32 %v34, 4294901760
    %v86 = vsub.f32 %v34, %v85
    %v87 = vand.u32 %v86, 4294901760
    %v88 = vsub.f32 %v86, %v87
    %v89 = vand.u32 %v88, 4294901760
    %90 = vmatpush.msra.mxu0 %v89
    %v91 = vand.u32 %v33, 4294901760
    %v92 = vsub.f32 %v33, %v91
    %v93 = vand.u32 %v92, 4294901760
    %v94 = vsub.f32 %v92, %v93
    %v95 = vand.u32 %v94, 4294901760
    %96 = vmatpush.msra.mxu0 %v95
    %v97 = vand.u32 %v32, 4294901760
    %v98 = vsub.f32 %v32, %v97
    %v99 = vand.u32 %v98, 4294901760
    %v100 = vsub.f32 %v98, %v99
    %v101 = vand.u32 %v100, 4294901760
    %102 = vmatpush.msra.mxu0 %v101
    %v103 = vand.u32 %v31, 4294901760
    %v104 = vsub.f32 %v31, %v103
    %v105 = vand.u32 %v104, 4294901760
    %v106 = vsub.f32 %v104, %v105
    %v107 = vand.u32 %v106, 4294901760
    %108 = vmatpush.msra.mxu0 %v107
    %v109 = vand.u32 %v30, 4294901760
    %v110 = vsub.f32 %v30, %v109
    %v111 = vand.u32 %v110, 4294901760
    %v112 = vsub.f32 %v110, %v111
    %v113 = vand.u32 %v112, 4294901760
    %114 = vmatpush.msra.mxu0 %v113
    %v115 = vand.u32 %v29, 4294901760
    %v116 = vsub.f32 %v29, %v115
    %v117 = vand.u32 %v116, 4294901760
    %v118 = vsub.f32 %v116, %v117
    %v119 = vand.u32 %v118, 4294901760
    %120 = vmatpush.msra.mxu0 %v119
    %v121 = vand.u32 %v28, 4294901760
    %v122 = vsub.f32 %v28, %v121
    %v123 = vand.u32 %v122, 4294901760
    %v124 = vsub.f32 %v122, %v123
    %v125 = vand.u32 %v124, 4294901760
    %126 = vmatpush.msra.mxu0 %v125
    %v127 = vand.u32 %v27, 4294901760
    %v128 = vsub.f32 %v27, %v127
    %v129 = vand.u32 %v128, 4294901760
    %v130 = vsub.f32 %v128, %v129
    %v131 = vand.u32 %v130, 4294901760
    %132 = vmatpush.msra.mxu0 %v131
    %v133 = vand.u32 %v26, 4294901760
    %v134 = vsub.f32 %v26, %v133
    %v135 = vand.u32 %v134, 4294901760
    %v136 = vsub.f32 %v134, %v135
    %v137 = vand.u32 %v136, 4294901760
    %138 = vmatpush.msra.mxu0 %v137
    %v139 = vand.u32 %v25, 4294901760
    %v140 = vsub.f32 %v25, %v139
    %v141 = vand.u32 %v140, 4294901760
    %v142 = vsub.f32 %v140, %v141
    %v143 = vand.u32 %v142, 4294901760
    %144 = vmatpush.msra.mxu0 %v143
    %v145 = vand.u32 %v24, 4294901760
    %v146 = vsub.f32 %v24, %v145
    %v147 = vand.u32 %v146, 4294901760
    %v148 = vsub.f32 %v146, %v147
    %v149 = vand.u32 %v148, 4294901760
    %150 = vmatpush.msra.mxu0 %v149
    %v151 = vand.u32 %v23, 4294901760
    %v152 = vsub.f32 %v23, %v151
    %v153 = vand.u32 %v152, 4294901760
    %v154 = vsub.f32 %v152, %v153
    %v155 = vand.u32 %v154, 4294901760
    %156 = vmatpush.msra.mxu0 %v155
    %v157 = vand.u32 %v22, 4294901760
    %v158 = vsub.f32 %v22, %v157
    %v159 = vand.u32 %v158, 4294901760
    %v160 = vsub.f32 %v158, %v159
    %v161 = vand.u32 %v160, 4294901760
    %162 = vmatpush.msra.mxu0 %v161
    %v163 = vand.u32 %v21, 4294901760
    %v164 = vsub.f32 %v21, %v163
    %v165 = vand.u32 %v164, 4294901760
    %v166 = vsub.f32 %v164, %v165
    %v167 = vand.u32 %v166, 4294901760
    %168 = vmatpush.msra.mxu0 %v167
    %v169 = vand.u32 %v20, 4294901760
    %v170 = vsub.f32 %v20, %v169
    %v171 = vand.u32 %v170, 4294901760
    %v172 = vsub.f32 %v170, %v171
    %v173 = vand.u32 %v172, 4294901760
    %174 = vmatpush.msra.mxu0 %v173
    %v175 = vand.u32 %v19, 4294901760
    %176 = vmatmul.f32.gmra.mxu0 %v175
    %v177 = vpop.f32.mrf.mxu0
    %v178 = vadd.f32 %v77, %v177
    %179 = vdwg.mxu0
    %v180 = vand.u32 %v35, 4294901760
    %v181 = vsub.f32 %v35, %v180
    %182 = vmatpush.msra.mxu0 %v181
    %v183 = vand.u32 %v34, 4294901760
    %v184 = vsub.f32 %v34, %v183
    %185 = vmatpush.msra.mxu0 %v184
    %v186 = vand.u32 %v33, 4294901760
    %v187 = vsub.f32 %v33, %v186
    %188 = vmatpush.msra.mxu0 %v187
    %v189 = vand.u32 %v32, 4294901760
    %v190 = vsub.f32 %v32, %v189
    %191 = vmatpush.msra.mxu0 %v190
    %v192 = vand.u32 %v31, 4294901760
    %v193 = vsub.f32 %v31, %v192
    %194 = vmatpush.msra.mxu0 %v193
    %v195 = vand.u32 %v30, 4294901760
    %v196 = vsub.f32 %v30, %v195
    %197 = vmatpush.msra.mxu0 %v196
    %v198 = vand.u32 %v29, 4294901760
    %v199 = vsub.f32 %v29, %v198
    %200 = vmatpush.msra.mxu0 %v199
    %v201 = vand.u32 %v28, 4294901760
    %v202 = vsub.f32 %v28, %v201
    %203 = vmatpush.msra.mxu0 %v202
    %v204 = vand.u32 %v27, 4294901760
    %v205 = vsub.f32 %v27, %v204
    %206 = vmatpush.msra.mxu0 %v205
    %v207 = vand.u32 %v26, 4294901760
    %v208 = vsub.f32 %v26, %v207
    %209 = vmatpush.msra.mxu0 %v208
    %v210 = vand.u32 %v25, 4294901760
    %v211 = vsub.f32 %v25, %v210
    %212 = vmatpush.msra.mxu0 %v211
    %v213 = vand.u32 %v24, 4294901760
    %v214 = vsub.f32 %v24, %v213
    %215 = vmatpush.msra.mxu0 %v214
    %v216 = vand.u32 %v23, 4294901760
    %v217 = vsub.f32 %v23, %v216
    %218 = vmatpush.msra.mxu0 %v217
    %v219 = vand.u32 %v22, 4294901760
    %v220 = vsub.f32 %v22, %v219
    %221 = vmatpush.msra.mxu0 %v220
    %v222 = vand.u32 %v21, 4294901760
    %v223 = vsub.f32 %v21, %v222
    %224 = vmatpush.msra.mxu0 %v223
    %v225 = vand.u32 %v20, 4294901760
    %v226 = vsub.f32 %v20, %v225
    %227 = vmatpush.msra.mxu0 %v226
    %v228 = vand.u32 %v19, 4294901760
    %v229 = vsub.f32 %v19, %v228
    %230 = vmatmul.f32.gmra.mxu0 %v229
    %v231 = vpop.f32.mrf.mxu0
    %v232 = vadd.f32 %v178, %v231
    %233 = vdwg.mxu0
    %v234 = vand.u32 %v35, 4294901760
    %235 = vmatpush.msra.mxu0 %v234
    %v236 = vand.u32 %v34, 4294901760
    %237 = vmatpush.msra.mxu0 %v236
    %v238 = vand.u32 %v33, 4294901760
    %239 = vmatpush.msra.mxu0 %v238
    %v240 = vand.u32 %v32, 4294901760
    %241 = vmatpush.msra.mxu0 %v240
    %v242 = vand.u32 %v31, 4294901760
    %243 = vmatpush.msra.mxu0 %v242
    %v244 = vand.u32 %v30, 4294901760
    %245 = vmatpush.msra.mxu0 %v244
    %v246 = vand.u32 %v29, 4294901760
    %247 = vmatpush.msra.mxu0 %v246
    %v248 = vand.u32 %v28, 4294901760
    %249 = vmatpush.msra.mxu0 %v248
    %v250 = vand.u32 %v27, 4294901760
    %251 = vmatpush.msra.mxu0 %v250
    %v252 = vand.u32 %v26, 4294901760
    %253 = vmatpush.msra.mxu0 %v252
    %v254 = vand.u32 %v25, 4294901760
    %255 = vmatpush.msra.mxu0 %v254
    %v256 = vand.u32 %v24, 4294901760
    %257 = vmatpush.msra.mxu0 %v256
    %v258 = vand.u32 %v23, 4294901760
    %259 = vmatpush.msra.mxu0 %v258
    %v260 = vand.u32 %v22, 4294901760
    %261 = vmatpush.msra.mxu0 %v260
    %v262 = vand.u32 %v21, 4294901760
    %263 = vmatpush.msra.mxu0 %v262
    %v264 = vand.u32 %v20, 4294901760
    %265 = vmatpush.msra.mxu0 %v264
    %v266 = vand.u32 %v19, 4294901760
    %v267 = vsub.f32 %v19, %v266
    %v268 = vand.u32 %v267, 4294901760
    %269 = vmatmul.f32.gmra.mxu0 %v268
    %v270 = vpop.f32.mrf.mxu0
    %v271 = vadd.f32 %v232, %v270
    %272 = vdwg.mxu0
    %v273 = vand.u32 %v35, 4294901760
    %v274 = vsub.f32 %v35, %v273
    %v275 = vand.u32 %v274, 4294901760
    %276 = vmatpush.msra.mxu0 %v275
    %v277 = vand.u32 %v34, 4294901760
    %v278 = vsub.f32 %v34, %v277
    %v279 = vand.u32 %v278, 4294901760
    %280 = vmatpush.msra.mxu0 %v279
    %v281 = vand.u32 %v33, 4294901760
    %v282 = vsub.f32 %v33, %v281
    %v283 = vand.u32 %v282, 4294901760
    %284 = vmatpush.msra.mxu0 %v283
    %v285 = vand.u32 %v32, 4294901760
    %v286 = vsub.f32 %v32, %v285
    %v287 = vand.u32 %v286, 4294901760
    %288 = vmatpush.msra.mxu0 %v287
    %v289 = vand.u32 %v31, 4294901760
    %v290 = vsub.f32 %v31, %v289
    %v291 = vand.u32 %v290, 4294901760
    %292 = vmatpush.msra.mxu0 %v291
    %v293 = vand.u32 %v30, 4294901760
    %v294 = vsub.f32 %v30, %v293
    %v295 = vand.u32 %v294, 4294901760
    %296 = vmatpush.msra.mxu0 %v295
    %v297 = vand.u32 %v29, 4294901760
    %v298 = vsub.f32 %v29, %v297
    %v299 = vand.u32 %v298, 4294901760
    %300 = vmatpush.msra.mxu0 %v299
    %v301 = vand.u32 %v28, 4294901760
    %v302 = vsub.f32 %v28, %v301
    %v303 = vand.u32 %v302, 4294901760
    %304 = vmatpush.msra.mxu0 %v303
    %v305 = vand.u32 %v27, 4294901760
    %v306 = vsub.f32 %v27, %v305
    %v307 = vand.u32 %v306, 4294901760
    %308 = vmatpush.msra.mxu0 %v307
    %v309 = vand.u32 %v26, 4294901760
    %v310 = vsub.f32 %v26, %v309
    %v311 = vand.u32 %v310, 4294901760
    %312 = vmatpush.msra.mxu0 %v311
    %v313 = vand.u32 %v25, 4294901760
    %v314 = vsub.f32 %v25, %v313
    %v315 = vand.u32 %v314, 4294901760
    %316 = vmatpush.msra.mxu0 %v315
    %v317 = vand.u32 %v24, 4294901760
    %v318 = vsub.f32 %v24, %v317
    %v319 = vand.u32 %v318, 4294901760
    %320 = vmatpush.msra.mxu0 %v319
    %v321 = vand.u32 %v23, 4294901760
    %v322 = vsub.f32 %v23, %v321
    %v323 = vand.u32 %v322, 4294901760
    %324 = vmatpush.msra.mxu0 %v323
    %v325 = vand.u32 %v22, 4294901760
    %v326 = vsub.f32 %v22, %v325
    %v327 = vand.u32 %v326, 4294901760
    %328 = vmatpush.msra.mxu0 %v327
    %v329 = vand.u32 %v21, 4294901760
    %v330 = vsub.f32 %v21, %v329
    %v331 = vand.u32 %v330, 4294901760
    %332 = vmatpush.msra.mxu0 %v331
    %v333 = vand.u32 %v20, 4294901760
    %v334 = vsub.f32 %v20, %v333
    %v335 = vand.u32 %v334, 4294901760
    %336 = vmatpush.msra.mxu0 %v335
    %v337 = vand.u32 %v19, 4294901760
    %338 = vmatmul.f32.gmra.mxu0 %v337
    %v339 = vpop.f32.mrf.mxu0
    %v340 = vadd.f32 %v271, %v339
    %341 = vdwg.mxu0
    %v342 = vand.u32 %v35, 4294901760
    %343 = vmatpush.msra.mxu0 %v342
    %v344 = vand.u32 %v34, 4294901760
    %345 = vmatpush.msra.mxu0 %v344
    %v346 = vand.u32 %v33, 4294901760
    %347 = vmatpush.msra.mxu0 %v346
    %v348 = vand.u32 %v32, 4294901760
    %349 = vmatpush.msra.mxu0 %v348
    %v350 = vand.u32 %v31, 4294901760
    %351 = vmatpush.msra.mxu0 %v350
    %v352 = vand.u32 %v30, 4294901760
    %353 = vmatpush.msra.mxu0 %v352
    %v354 = vand.u32 %v29, 4294901760
    %355 = vmatpush.msra.mxu0 %v354
    %v356 = vand.u32 %v28, 4294901760
    %357 = vmatpush.msra.mxu0 %v356
    %v358 = vand.u32 %v27, 4294901760
    %359 = vmatpush.msra.mxu0 %v358
    %v360 = vand.u32 %v26, 4294901760
    %361 = vmatpush.msra.mxu0 %v360
    %v362 = vand.u32 %v25, 4294901760
    %363 = vmatpush.msra.mxu0 %v362
    %v364 = vand.u32 %v24, 4294901760
    %365 = vmatpush.msra.mxu0 %v364
    %v366 = vand.u32 %v23, 4294901760
    %367 = vmatpush.msra.mxu0 %v366
    %v368 = vand.u32 %v22, 4294901760
    %369 = vmatpush.msra.mxu0 %v368
    %v370 = vand.u32 %v21, 4294901760
    %371 = vmatpush.msra.mxu0 %v370
    %v372 = vand.u32 %v20, 4294901760
    %373 = vmatpush.msra.mxu0 %v372
    %v374 = vand.u32 %v19, 4294901760
    %375 = vmatmul.f32.gmra.mxu0 %v374
    %v376 = vpop.f32.mrf.mxu0
    %v377 = vadd.f32 %v340, %v376
    %378 = vdwg.mxu0
    %v379 = vxor.u32 %v377, 2147483648
    %v380 = vmul.f32 %v379, 1.442695
    %v381 = vpow.pop %v380
    %v382 = vadd.f32 %v381, 1.0
    %v383 = vrcp.pop %v382
    %v384 = vmul.f32 %v382, %v383
    %v385 = vsub.f32 1.0, %v384
    %v386 = vmul.f32 %v383, %v385
    %v387 = vadd.f32 %v383, %v386
    %vm388 = vweird.f32 %v382
    %vm389 = vweird.f32 %v383
    %vm390 = vmor %vm388, %vm389
    %v391 = vsel %vm390, %v383, %v387
    %v392 = vand.u32 2147483647, %v382
    %vm393 = vcmp.eq.f32.partialorder %v392, 8.507059e+37
    %v394 = vand.u32 %v382, 2147483648
    %v395 = vor.u32 1.1754944e-38, %v394
    %v396 = vsel %vm393, %v395, %v391
    %v397 = vmul.f32 1.0, %v396
    %v398 = vld [vmem:[%s2] sm:$0xf]
    %vm399 = vcmask 31744
    %v401 = vsel %vm399, %v397, 0
    %vm403 = vcmask 1043456
    %v405 = vsel %vm403, %v398, 0
    %407 = vmatpush.msra.mxu0 0.0
    %408 = vmatpush.msra.mxu0 0.0
    %409 = vmatpush.msra.mxu0 0.0
    %410 = vmatpush.msra.mxu0 0.0
    %411 = vmatpush.msra.mxu0 0.0
    %412 = vmatpush.msra.mxu0 0.0
    %413 = vmatpush.msra.mxu0 0.0
    %414 = vmatpush.msra.mxu0 0.0
    %415 = vmatpush.msra.mxu0 0.0
    %416 = vmatpush.msra.mxu0 0.0
    %417 = vmatpush.msra.mxu0 0.0
    %418 = vmatpush.msra.mxu0 0.0
    %419 = vmatpush.msra.mxu0 0.0
    %420 = vmatpush.msra.mxu0 0.0
    %421 = vmatpush.msra.mxu0 0.0
    %v422 = vand.u32 %v405, 4294901760
    %423 = vmatpush.msra.mxu0 %v422
    %v424 = vand.u32 %v401, 4294901760
    %v425 = vsub.f32 %v401, %v424
    %v426 = vand.u32 %v425, 4294901760
    %v427 = vsub.f32 %v425, %v426
    %v428 = vand.u32 %v427, 4294901760
    %429 = vmatmul.f32.gmra.mxu0 %v428
    %v430 = vpop.f32.mrf.mxu0
    %v431 = vadd.f32 0.0, %v430
    %432 = vdwg.mxu0
    %433 = vmatpush.msra.mxu0 0.0
    %434 = vmatpush.msra.mxu0 0.0
    %435 = vmatpush.msra.mxu0 0.0
    %436 = vmatpush.msra.mxu0 0.0
    %437 = vmatpush.msra.mxu0 0.0
    %438 = vmatpush.msra.mxu0 0.0
    %439 = vmatpush.msra.mxu0 0.0
    %440 = vmatpush.msra.mxu0 0.0
    %441 = vmatpush.msra.mxu0 0.0
    %442 = vmatpush.msra.mxu0 0.0
    %443 = vmatpush.msra.mxu0 0.0
    %444 = vmatpush.msra.mxu0 0.0
    %445 = vmatpush.msra.mxu0 0.0
    %446 = vmatpush.msra.mxu0 0.0
    %447 = vmatpush.msra.mxu0 0.0
    %v448 = vand.u32 %v405, 4294901760
    %v449 = vsub.f32 %v405, %v448
    %v450 = vand.u32 %v449, 4294901760
    %v451 = vsub.f32 %v449, %v450
    %v452 = vand.u32 %v451, 4294901760
    %453 = vmatpush.msra.mxu0 %v452
    %v454 = vand.u32 %v401, 4294901760
    %455 = vmatmul.f32.gmra.mxu0 %v454
    %v456 = vpop.f32.mrf.mxu0
    %v457 = vadd.f32 %v431, %v456
    %458 = vdwg.mxu0
    %459 = vmatpush.msra.mxu0 0.0
    %460 = vmatpush.msra.mxu0 0.0
    %461 = vmatpush.msra.mxu0 0.0
    %462 = vmatpush.msra.mxu0 0.0
    %463 = vmatpush.msra.mxu0 0.0
    %464 = vmatpush.msra.mxu0 0.0
    %465 = vmatpush.msra.mxu0 0.0
    %466 = vmatpush.msra.mxu0 0.0
    %467 = vmatpush.msra.mxu0 0.0
    %468 = vmatpush.msra.mxu0 0.0
    %469 = vmatpush.msra.mxu0 0.0
    %470 = vmatpush.msra.mxu0 0.0
    %471 = vmatpush.msra.mxu0 0.0
    %472 = vmatpush.msra.mxu0 0.0
    %473 = vmatpush.msra.mxu0 0.0
    %v474 = vand.u32 %v405, 4294901760
    %v475 = vsub.f32 %v405, %v474
    %476 = vmatpush.msra.mxu0 %v475
    %v477 = vand.u32 %v401, 4294901760
    %v478 = vsub.f32 %v401, %v477
    %479 = vmatmul.f32.gmra.mxu0 %v478
    %v480 = vpop.f32.mrf.mxu0
    %v481 = vadd.f32 %v457, %v480
    %482 = vdwg.mxu0
    %483 = vmatpush.msra.mxu0 0.0
    %484 = vmatpush.msra.mxu0 0.0
    %485 = vmatpush.msra.mxu0 0.0
    %486 = vmatpush.msra.mxu0 0.0
    %487 = vmatpush.msra.mxu0 0.0
    %488 = vmatpush.msra.mxu0 0.0
    %489 = vmatpush.msra.mxu0 0.0
    %490 = vmatpush.msra.mxu0 0.0
    %491 = vmatpush.msra.mxu0 0.0
    %492 = vmatpush.msra.mxu0 0.0
    %493 = vmatpush.msra.mxu0 0.0
    %494 = vmatpush.msra.mxu0 0.0
    %495 = vmatpush.msra.mxu0 0.0
    %496 = vmatpush.msra.mxu0 0.0
    %497 = vmatpush.msra.mxu0 0.0
    %v498 = vand.u32 %v405, 4294901760
    %499 = vmatpush.msra.mxu0 %v498
    %v500 = vand.u32 %v401, 4294901760
    %v501 = vsub.f32 %v401, %v500
    %v502 = vand.u32 %v501, 4294901760
    %503 = vmatmul.f32.gmra.mxu0 %v502
    %v504 = vpop.f32.mrf.mxu0
    %v505 = vadd.f32 %v481, %v504
    %506 = vdwg.mxu0
    %507 = vmatpush.msra.mxu0 0.0
    %508 = vmatpush.msra.mxu0 0.0
    %509 = vmatpush.msra.mxu0 0.0
    %510 = vmatpush.msra.mxu0 0.0
    %511 = vmatpush.msra.mxu0 0.0
    %512 = vmatpush.msra.mxu0 0.0
    %513 = vmatpush.msra.mxu0 0.0
    %514 = vmatpush.msra.mxu0 0.0
    %515 = vmatpush.msra.mxu0 0.0
    %516 = vmatpush.msra.mxu0 0.0
    %517 = vmatpush.msra.mxu0 0.0
    %518 = vmatpush.msra.mxu0 0.0
    %519 = vmatpush.msra.mxu0 0.0
    %520 = vmatpush.msra.mxu0 0.0
    %521 = vmatpush.msra.mxu0 0.0
    %v522 = vand.u32 %v405, 4294901760
    %v523 = vsub.f32 %v405, %v522
    %v524 = vand.u32 %v523, 4294901760
    %525 = vmatpush.msra.mxu0 %v524
    %v526 = vand.u32 %v401, 4294901760
    %527 = vmatmul.f32.gmra.mxu0 %v526
    %v528 = vpop.f32.mrf.mxu0
    %v529 = vadd.f32 %v505, %v528
    %530 = vdwg.mxu0
    %531 = vmatpush.msra.mxu0 0.0
    %532 = vmatpush.msra.mxu0 0.0
    %533 = vmatpush.msra.mxu0 0.0
    %534 = vmatpush.msra.mxu0 0.0
    %535 = vmatpush.msra.mxu0 0.0
    %536 = vmatpush.msra.mxu0 0.0
    %537 = vmatpush.msra.mxu0 0.0
    %538 = vmatpush.msra.mxu0 0.0
    %539 = vmatpush.msra.mxu0 0.0
    %540 = vmatpush.msra.mxu0 0.0
    %541 = vmatpush.msra.mxu0 0.0
    %542 = vmatpush.msra.mxu0 0.0
    %543 = vmatpush.msra.mxu0 0.0
    %544 = vmatpush.msra.mxu0 0.0
    %545 = vmatpush.msra.mxu0 0.0
    %v546 = vand.u32 %v405, 4294901760
    %547 = vmatpush.msra.mxu0 %v546
    %v548 = vand.u32 %v401, 4294901760
    %549 = vmatmul.f32.gmra.mxu0 %v548
    %v550 = vpop.f32.mrf.mxu0
    %v551 = vadd.f32 %v529, %v550
    %552 = vdwg.mxu0
    %v553 = vmul.f32 %v19, %v551
    %554 = vst [vmem:[#allocation3] sm:$0xf] %v553
    // Predicated region
    $region18: #{tpu_custom_call.1} parent=1 // pred_check
      _
    $region19: #{tpu_custom_call.1} parent=1 // pred_check_branch
      %556 = sbr.rel (0) target = $region21
    $region20: #{tpu_custom_call.1} parent=1 // pred_region
      %558 = vsyncadd [#allocation4], 0
      %s560 = sshll.u32 [#allocation3], 4
      %s561 = int_to_ptr.vmem [resolvable:$true] %s560
      %s562 = sshll.u32 %s4, 4
      %s563 = int_to_ptr.hbm [resolvable:$true] %s562
      %565 = dma.vmem_to_hbm [thread:$0]  %s561, 64, %s563, [#allocation4]
    $region21: #{tpu_custom_call.1} parent=1 // pred_fallthru
      _
    // Predicated region
    $region22: #{tpu_custom_call.1} parent=1 // pred_check
      _
    $region23: #{tpu_custom_call.1} parent=1 // pred_check_branch
      %567 = sbr.rel (0) target = $region25
    $region24: #{tpu_custom_call.1} parent=1 // pred_region
      %569 = dma.done [#allocation4], 64
    $region25: #{tpu_custom_call.1} parent=1 // pred_fallthru
      _
    %570 = vsyncpa [#allocation4], 1

</llo_original>
